<compile_context>
chip_gen: v6e
topology: v6e:2x2x1
jax: 0.10.0
libtpu: 0.0.40
codegen_flags: <defaults>
</compile_context>

<pallas_src>
import functools

import jax
import jax.numpy as jnp
from jax.experimental import pallas as pl
from jax.experimental.pallas import tpu as pltpu

EPS = 1e-5


def _round_up(x, m):
    return (x + m - 1) // m * m


def _critic_kernel(s_ref, a_ref, p_ref, o_ref, *, S, A, H1, H2, w1_off, w2_off):
    """One grid step = one independent minibatch of B rows.

    s_ref: (B, S)   a_ref: (B, A)   p_ref: (rows, L) packed, VMEM-resident
    o_ref: (1, 1, B) lane-dense output row for this minibatch
    """
    x = s_ref[...].astype(jnp.float32)              # (B, S)
    a = a_ref[...].astype(jnp.float32)              # (B, A)
    B = s_ref.shape[0]
    inv_b = 1.0 / B                                  # compile-time constant

    # Static slices of the resident parameter slab.
    gamma0 = p_ref[0:1, :S]
    beta0 = p_ref[1:2, :S]
    b1 = p_ref[2:3, :H1]
    gamma1 = p_ref[3:4, :H1]
    beta1 = p_ref[4:5, :H1]
    b2 = p_ref[5:6, :H2]
    w3 = p_ref[6:7, :H2]                             # fc3 weight row (1, H2)
    b3 = p_ref[7:8, 0:1]                             # (1, 1)
    w1 = p_ref[w1_off:w1_off + S, :H1]               # (S, H1)
    w2s = p_ref[w2_off:w2_off + H1, :H2]             # (H1, H2) state half
    w2a = p_ref[w2_off + H1:w2_off + H1 + A, :H2]    # (A,  H2) action half

    # ---- BN0(state): one reduction sweep, fused scale/shift ----
    mean0 = jnp.sum(x, axis=0, keepdims=True) * inv_b
    var0 = jnp.maximum(
        jnp.sum(x * x, axis=0, keepdims=True) * inv_b - mean0 * mean0, 0.0)
    scale0 = gamma0 * jax.lax.rsqrt(var0 + EPS)
    x = x * scale0 + (beta0 - mean0 * scale0)

    # ---- fc1 + ReLU ----
    h = jnp.dot(x, w1, preferred_element_type=jnp.float32) + b1
    h = jnp.maximum(h, 0.0)

    # ---- BN1(out): fused ----
    mean1 = jnp.sum(h, axis=0, keepdims=True) * inv_b
    var1 = jnp.maximum(
        jnp.sum(h * h, axis=0, keepdims=True) * inv_b - mean1 * mean1, 0.0)
    scale1 = gamma1 * jax.lax.rsqrt(var1 + EPS)
    h = h * scale1 + (beta1 - mean1 * scale1)

    # ---- fc2(cat(out, a)) + ReLU: concat realized as two dots over static
    #      sublane slices of the single resident weight slab ----
    h2 = (jnp.dot(h, w2s, preferred_element_type=jnp.float32)
          + jnp.dot(a, w2a, preferred_element_type=jnp.float32)
          + b2)
    h2 = jnp.maximum(h2, 0.0)

    # ---- fc3: (1,H2) x (B,H2)^T -> lane-dense (1, B) row, unmasked store ----
    qrow = jax.lax.dot_general(
        w3, h2, (((1,), (1,)), ((), ())),
        preferred_element_type=jnp.float32) + b3     # (1, B)
    o_ref[...] = qrow.reshape(1, 1, B).astype(o_ref.dtype)


def build_critic_forward(dims, batch_per_step):
    S, A, H1, H2 = dims["S"], dims["A"], dims["H1"], dims["H2"]
    w1_off, w2_off = dims["w1_off"], dims["w2_off"]
    rows, L = dims["rows"], dims["L"]
    B = batch_per_step

    kernel = functools.partial(
        _critic_kernel, S=S, A=A, H1=H1, H2=H2, w1_off=w1_off, w2_off=w2_off)

    @jax.jit
    def forward(state, action, slab):
        # state: (N*B, S), action: (N*B, A)  ->  (N*B, 1)
        total = state.shape[0]
        assert total % B == 0, (total, B)
        n = total // B
        out = pl.pallas_call(
            kernel,
            out_shape=jax.ShapeDtypeStruct((n, 1, B), jnp.float32),
            grid_spec=pltpu.PrefetchScalarGridSpec(
                num_scalar_prefetch=0,
                grid=(n,),
                in_specs=[
                    pl.BlockSpec((B, S), lambda i: (i, 0)),     # streamed
                    pl.BlockSpec((B, A), lambda i: (i, 0)),     # streamed
                    pl.BlockSpec((rows, L), lambda i: (0, 0)),  # resident
                ],
                out_specs=pl.BlockSpec((1, 1, B), lambda i: (i, 0, 0)),
            ),
            compiler_params=pltpu.CompilerParams(
                dimension_semantics=("parallel",)),
        )(state, action, slab)
        # out[i, 0, b] is the critic value for input row i*B + b.
        return out.reshape(total, 1)

    return forward


def make_params(key, state_dim, action_dim, hidden1, hidden2, init_w=3e-4):
    """Logical parameters, mirroring the PyTorch module's init."""
    ks = jax.random.split(key, 6)

    def uniform(k, shape, bound):
        return jax.random.uniform(k, shape, jnp.float32, -bound, bound)

    # fanin_init in the reference uses size[0] of the (out, in) weight.
    w1 = uniform(ks[0], (hidden1, state_dim), hidden1 ** -0.5)
    b1 = uniform(ks[1], (1, hidden1), state_dim ** -0.5)
    w2 = uniform(ks[2], (hidden2, hidden1 + action_dim), hidden2 ** -0.5)
    b2 = uniform(ks[3], (1, hidden2), (hidden1 + action_dim) ** -0.5)
    w3 = uniform(ks[4], (1, hidden2), init_w)
    b3 = uniform(ks[5], (1, 1), hidden2 ** -0.5)

    return {
        "w1_t": w1.T,          # (S, H1)
        "b1": b1,              # (1, H1)
        "w2_t": w2.T,          # (H1 + A, H2) -- state rows first, then action
        "b2": b2,              # (1, H2)
        "w3_t": w3.T,          # (H2, 1)
        "b3": b3,              # (1, 1)
        "gamma0": jnp.ones((1, state_dim), jnp.float32),
        "beta0": jnp.zeros((1, state_dim), jnp.float32),
        "gamma1": jnp.ones((1, hidden1), jnp.float32),
        "beta1": jnp.zeros((1, hidden1), jnp.float32),
    }


def pack_params(p, state_dim, action_dim, hidden1, hidden2):
    """Pack ALL parameters into one (rows, 128)-padded f32 slab (1 operand)."""
    S, A, H1, H2 = state_dim, action_dim, hidden1, hidden2
    L = _round_up(max(S, H1, H2), 128)
    w1_off = 8                                   # sublane-aligned
    w2_off = _round_up(w1_off + S, 8)            # sublane-aligned
    rows = _round_up(w2_off + H1 + A, 8)
    slab = jnp.zeros((rows, L), jnp.float32)

    def put_row(sl, r, v):
        v = jnp.asarray(v, jnp.float32).reshape(-1)
        return sl.at[r, : v.shape[0]].set(v)

    slab = put_row(slab, 0, p["gamma0"])
    slab = put_row(slab, 1, p["beta0"])
    slab = put_row(slab, 2, p["b1"])
    slab = put_row(slab, 3, p["gamma1"])
    slab = put_row(slab, 4, p["beta1"])
    slab = put_row(slab, 5, p["b2"])
    slab = put_row(slab, 6, p["w3_t"])
    slab = put_row(slab, 7, p["b3"])
    slab = slab.at[w1_off:w1_off + S, :H1].set(jnp.asarray(p["w1_t"], jnp.float32))
    slab = slab.at[w2_off:w2_off + H1 + A, :H2].set(
        jnp.asarray(p["w2_t"], jnp.float32))

    dims = dict(S=S, A=A, H1=H1, H2=H2, w1_off=w1_off, w2_off=w2_off,
                rows=rows, L=L)
    return slab, dims


def critic_reference(state, action, p):
    """Pure-JAX reference of the same forward pass (one minibatch)."""
    x = state
    m0 = x.mean(0, keepdims=True)
    v0 = ((x - m0) ** 2).mean(0, keepdims=True)
    x = (x - m0) / jnp.sqrt(v0 + EPS) * p["gamma0"] + p["beta0"]
    h = jnp.maximum(x @ p["w1_t"] + p["b1"], 0.0)
    m1 = h.mean(0, keepdims=True)
    v1 = ((h - m1) ** 2).mean(0, keepdims=True)
    h = (h - m1) / jnp.sqrt(v1 + EPS) * p["gamma1"] + p["beta1"]
    cat = jnp.concatenate([h, action], axis=1)
    h2 = jnp.maximum(cat @ p["w2_t"] + p["b2"], 0.0)
    return h2 @ p["w3_t"] + p["b3"]


if __name__ == "__main__":
    STATE_DIM, ACTION_DIM = 16, 8
    HIDDEN1, HIDDEN2 = 32, 16
    B_STEP = 128      # rows per grid step (one minibatch -> lane-dense output)
    N_STEPS = 4       # independent minibatches amortized over one pallas_call

    key = jax.random.PRNGKey(0)
    k_s, k_a, k_p = jax.random.split(key, 3)
    state = jax.random.normal(k_s, (N_STEPS * B_STEP, STATE_DIM), jnp.float32)
    action = jax.random.normal(k_a, (N_STEPS * B_STEP, ACTION_DIM), jnp.float32)

    logical = make_params(k_p, STATE_DIM, ACTION_DIM, HIDDEN1, HIDDEN2)
    slab, dims = pack_params(logical, STATE_DIM, ACTION_DIM, HIDDEN1, HIDDEN2)

    critic_forward = build_critic_forward(dims, B_STEP)
    out = jax.block_until_ready(critic_forward(state, action, slab))
    assert out.shape == (N_STEPS * B_STEP, 1), out.shape

    # Reference: the module applied independently to each minibatch (grid
    # step), training-mode BatchNorm (batch stats over that minibatch).
    refs = [critic_reference(state[i * B_STEP:(i + 1) * B_STEP],
                             action[i * B_STEP:(i + 1) * B_STEP], logical)
            for i in range(N_STEPS)]
    ref = jnp.concatenate(refs, axis=0)

    max_err = float(jnp.max(jnp.abs(out - ref)))
    assert jnp.allclose(out, ref, atol=1e-4, rtol=1e-4), max_err

    print("KERNEL_OK")
</pallas_src>

<mosaic_0001>
module attributes {stable_mosaic.version = 11 : i64} {
  func.func @_critic_kernel(%arg0: i32, %arg1: memref<128x16xf32, #tpu.memory_space<vmem>>, %arg2: memref<128x8xf32, #tpu.memory_space<vmem>>, %arg3: memref<64x128xf32, #tpu.memory_space<vmem>>, %arg4: memref<1x1x128xf32, #tpu.memory_space<vmem>>) attributes {dimension_semantics = [#tpu.dimension_semantics<parallel>], iteration_bounds = array<i64: 4>, scalar_prefetch = 0 : i64, scratch_operands = 0 : i64, tpu.core_type = #tpu.core_type<tc>, window_params = [{transform_indices = @transform_0, window_bounds = array<i64: 128, 16>}, {transform_indices = @transform_1, window_bounds = array<i64: 128, 8>}, {pipeline_mode = #tpu.pipeline_mode<synchronous>, transform_indices = @transform_2, window_bounds = array<i64: 64, 128>}, {transform_indices = @transform_3, window_bounds = array<i64: 1, 1, 128>}]} {
    %c0 = arith.constant 0 : index
    %c0_0 = arith.constant 0 : index
    %0 = vector.load %arg1[%c0, %c0_0] : memref<128x16xf32, #tpu.memory_space<vmem>>, vector<128x16xf32>
    %c0_1 = arith.constant 0 : index
    %c0_2 = arith.constant 0 : index
    %1 = vector.load %arg2[%c0_1, %c0_2] : memref<128x8xf32, #tpu.memory_space<vmem>>, vector<128x8xf32>
    %c0_3 = arith.constant 0 : index
    %c0_4 = arith.constant 0 : index
    %2 = vector.load %arg3[%c0_3, %c0_4] : memref<64x128xf32, #tpu.memory_space<vmem>>, vector<1x16xf32>
    %c1 = arith.constant 1 : index
    %c0_5 = arith.constant 0 : index
    %3 = vector.load %arg3[%c1, %c0_5] : memref<64x128xf32, #tpu.memory_space<vmem>>, vector<1x16xf32>
    %c2 = arith.constant 2 : index
    %c0_6 = arith.constant 0 : index
    %4 = vector.load %arg3[%c2, %c0_6] : memref<64x128xf32, #tpu.memory_space<vmem>>, vector<1x32xf32>
    %c3 = arith.constant 3 : index
    %c0_7 = arith.constant 0 : index
    %5 = vector.load %arg3[%c3, %c0_7] : memref<64x128xf32, #tpu.memory_space<vmem>>, vector<1x32xf32>
    %c4 = arith.constant 4 : index
    %c0_8 = arith.constant 0 : index
    %6 = vector.load %arg3[%c4, %c0_8] : memref<64x128xf32, #tpu.memory_space<vmem>>, vector<1x32xf32>
    %c5 = arith.constant 5 : index
    %c0_9 = arith.constant 0 : index
    %7 = vector.load %arg3[%c5, %c0_9] : memref<64x128xf32, #tpu.memory_space<vmem>>, vector<1x16xf32>
    %c6 = arith.constant 6 : index
    %c0_10 = arith.constant 0 : index
    %8 = vector.load %arg3[%c6, %c0_10] : memref<64x128xf32, #tpu.memory_space<vmem>>, vector<1x16xf32>
    %c7 = arith.constant 7 : index
    %c0_11 = arith.constant 0 : index
    %9 = vector.load %arg3[%c7, %c0_11] : memref<64x128xf32, #tpu.memory_space<vmem>>, vector<1x1xf32>
    %c8 = arith.constant 8 : index
    %c0_12 = arith.constant 0 : index
    %10 = vector.load %arg3[%c8, %c0_12] : memref<64x128xf32, #tpu.memory_space<vmem>>, vector<16x32xf32>
    %c24 = arith.constant 24 : index
    %c0_13 = arith.constant 0 : index
    %11 = vector.load %arg3[%c24, %c0_13] : memref<64x128xf32, #tpu.memory_space<vmem>>, vector<32x16xf32>
    %c56 = arith.constant 56 : index
    %c0_14 = arith.constant 0 : index
    %12 = vector.load %arg3[%c56, %c0_14] : memref<64x128xf32, #tpu.memory_space<vmem>>, vector<8x16xf32>
    %cst = arith.constant dense<0.000000e+00> : vector<16xf32>
    %13 = vector.multi_reduction <add>, %0, %cst [0] : vector<128x16xf32> to vector<16xf32>
    %14 = vector.shape_cast %13 : vector<16xf32> to vector<1x16xf32>
    %cst_15 = arith.constant 7.812500e-03 : f32
    %15 = vector.broadcast %cst_15 : f32 to vector<1x16xf32>
    %16 = arith.mulf %14, %15 : vector<1x16xf32>
    %17 = arith.mulf %0, %0 : vector<128x16xf32>
    %cst_16 = arith.constant dense<0.000000e+00> : vector<16xf32>
    %18 = vector.multi_reduction <add>, %17, %cst_16 [0] : vector<128x16xf32> to vector<16xf32>
    %19 = vector.shape_cast %18 : vector<16xf32> to vector<1x16xf32>
    %cst_17 = arith.constant 7.812500e-03 : f32
    %20 = vector.broadcast %cst_17 : f32 to vector<1x16xf32>
    %21 = arith.mulf %19, %20 : vector<1x16xf32>
    %22 = arith.mulf %16, %16 : vector<1x16xf32>
    %23 = arith.subf %21, %22 : vector<1x16xf32>
    %cst_18 = arith.constant 0.000000e+00 : f32
    %24 = vector.broadcast %cst_18 : f32 to vector<1x16xf32>
    %25 = arith.maximumf %23, %24 : vector<1x16xf32>
    %cst_19 = arith.constant 9.99999974E-6 : f32
    %26 = vector.broadcast %cst_19 : f32 to vector<1x16xf32>
    %27 = arith.addf %25, %26 : vector<1x16xf32>
    %28 = math.rsqrt %27 : vector<1x16xf32>
    %29 = arith.mulf %2, %28 : vector<1x16xf32>
    %30 = vector.broadcast %29 : vector<1x16xf32> to vector<128x16xf32>
    %31 = arith.mulf %0, %30 : vector<128x16xf32>
    %32 = arith.mulf %16, %29 : vector<1x16xf32>
    %33 = arith.subf %3, %32 : vector<1x16xf32>
    %34 = vector.broadcast %33 : vector<1x16xf32> to vector<128x16xf32>
    %35 = arith.addf %31, %34 : vector<128x16xf32>
    %cst_20 = arith.constant dense<0.000000e+00> : vector<128x32xf32>
    %36 = tpu.matmul %35, %10, %cst_20 {dimension_numbers = #tpu.dot_dimension_numbers<[1], [0], [0], [1], [0, 0, 1, 1], [], []>} : vector<128x16xf32>, vector<16x32xf32>, vector<128x32xf32> -> vector<128x32xf32>
    %37 = vector.broadcast %4 : vector<1x32xf32> to vector<128x32xf32>
    %38 = arith.addf %36, %37 : vector<128x32xf32>
    %cst_21 = arith.constant 0.000000e+00 : f32
    %39 = vector.broadcast %cst_21 : f32 to vector<128x32xf32>
    %40 = arith.maximumf %38, %39 : vector<128x32xf32>
    %cst_22 = arith.constant dense<0.000000e+00> : vector<32xf32>
    %41 = vector.multi_reduction <add>, %40, %cst_22 [0] : vector<128x32xf32> to vector<32xf32>
    %42 = vector.shape_cast %41 : vector<32xf32> to vector<1x32xf32>
    %cst_23 = arith.constant 7.812500e-03 : f32
    %43 = vector.broadcast %cst_23 : f32 to vector<1x32xf32>
    %44 = arith.mulf %42, %43 : vector<1x32xf32>
    %45 = arith.mulf %40, %40 : vector<128x32xf32>
    %cst_24 = arith.constant dense<0.000000e+00> : vector<32xf32>
    %46 = vector.multi_reduction <add>, %45, %cst_24 [0] : vector<128x32xf32> to vector<32xf32>
    %47 = vector.shape_cast %46 : vector<32xf32> to vector<1x32xf32>
    %cst_25 = arith.constant 7.812500e-03 : f32
    %48 = vector.broadcast %cst_25 : f32 to vector<1x32xf32>
    %49 = arith.mulf %47, %48 : vector<1x32xf32>
    %50 = arith.mulf %44, %44 : vector<1x32xf32>
    %51 = arith.subf %49, %50 : vector<1x32xf32>
    %cst_26 = arith.constant 0.000000e+00 : f32
    %52 = vector.broadcast %cst_26 : f32 to vector<1x32xf32>
    %53 = arith.maximumf %51, %52 : vector<1x32xf32>
    %cst_27 = arith.constant 9.99999974E-6 : f32
    %54 = vector.broadcast %cst_27 : f32 to vector<1x32xf32>
    %55 = arith.addf %53, %54 : vector<1x32xf32>
    %56 = math.rsqrt %55 : vector<1x32xf32>
    %57 = arith.mulf %5, %56 : vector<1x32xf32>
    %58 = vector.broadcast %57 : vector<1x32xf32> to vector<128x32xf32>
    %59 = arith.mulf %40, %58 : vector<128x32xf32>
    %60 = arith.mulf %44, %57 : vector<1x32xf32>
    %61 = arith.subf %6, %60 : vector<1x32xf32>
    %62 = vector.broadcast %61 : vector<1x32xf32> to vector<128x32xf32>
    %63 = arith.addf %59, %62 : vector<128x32xf32>
    %cst_28 = arith.constant dense<0.000000e+00> : vector<128x16xf32>
    %64 = tpu.matmul %63, %11, %cst_28 {dimension_numbers = #tpu.dot_dimension_numbers<[1], [0], [0], [1], [0, 0, 1, 1], [], []>} : vector<128x32xf32>, vector<32x16xf32>, vector<128x16xf32> -> vector<128x16xf32>
    %cst_29 = arith.constant dense<0.000000e+00> : vector<128x16xf32>
    %65 = tpu.matmul %1, %12, %cst_29 {dimension_numbers = #tpu.dot_dimension_numbers<[1], [0], [0], [1], [0, 0, 1, 1], [], []>} : vector<128x8xf32>, vector<8x16xf32>, vector<128x16xf32> -> vector<128x16xf32>
    %66 = arith.addf %64, %65 : vector<128x16xf32>
    %67 = vector.broadcast %7 : vector<1x16xf32> to vector<128x16xf32>
    %68 = arith.addf %66, %67 : vector<128x16xf32>
    %cst_30 = arith.constant 0.000000e+00 : f32
    %69 = vector.broadcast %cst_30 : f32 to vector<128x16xf32>
    %70 = arith.maximumf %68, %69 : vector<128x16xf32>
    %cst_31 = arith.constant dense<0.000000e+00> : vector<1x128xf32>
    %71 = tpu.matmul %8, %70, %cst_31 {dimension_numbers = #tpu.dot_dimension_numbers<[1], [1], [0], [0], [0, 0, 1, 0], [], []>} : vector<1x16xf32>, vector<128x16xf32>, vector<1x128xf32> -> vector<1x128xf32>
    %72 = vector.broadcast %9 : vector<1x1xf32> to vector<1x128xf32>
    %73 = arith.addf %71, %72 : vector<1x128xf32>
    %74 = vector.shape_cast %73 : vector<1x128xf32> to vector<1x1x128xf32>
    %c0_32 = arith.constant 0 : index
    %c0_33 = arith.constant 0 : index
    %c0_34 = arith.constant 0 : index
    %75 = vector.load %arg4[%c0_32, %c0_33, %c0_34] : memref<1x1x128xf32, #tpu.memory_space<vmem>>, vector<1x1x128xf32>
    tpu.vector_store %arg4[%c0_32, %c0_33, %c0_34], %74 {strides = array<i32>} : memref<1x1x128xf32, #tpu.memory_space<vmem>>, vector<1x1x128xf32>,
    return
  }
  func.func @transform_0(%arg0: i32) -> (i32, i32) {
    %c0_i32 = arith.constant 0 : i32
    %c0_i32_0 = arith.constant 0 : i32
    return %arg0, %c0_i32 : i32, i32
  }
  func.func @transform_1(%arg0: i32) -> (i32, i32) {
    %c0_i32 = arith.constant 0 : i32
    %c0_i32_0 = arith.constant 0 : i32
    return %arg0, %c0_i32 : i32, i32
  }
  func.func @transform_2(%arg0: i32) -> (i32, i32) {
    %c0_i32 = arith.constant 0 : i32
    %c0_i32_0 = arith.constant 0 : i32
    %c0_i32_1 = arith.constant 0 : i32
    return %c0_i32, %c0_i32_0 : i32, i32
  }
  func.func @transform_3(%arg0: i32) -> (i32, i32, i32) {
    %c0_i32 = arith.constant 0 : i32
    %c0_i32_0 = arith.constant 0 : i32
    %c0_i32_1 = arith.constant 0 : i32
    return %arg0, %c0_i32, %c0_i32_0 : i32, i32, i32
  }
}

</mosaic_0001>

<llo_original>
// kernel: forward.1
$region0: #{forward.1}
  #allocation0 [shape = 'u32[]', space=smem, size = 0x4, offset = 0x4, fixed_abs, tag = 'smem constant byte address 0x4 - core index']
  #allocation1 [shape = 'u32[144,128]{1,0:T(1,128)}', space=vmem, size = 0x12000, scoped, tag = 'internal scratch']
  %s0 = inlined_call_operand.vmem [shape: f32[512,16], index: 0, kind: input, shape index: {}]
  %s1 = inlined_call_operand.vmem [shape: f32[512,8], index: 1, kind: input, shape index: {}]
  %s2 = inlined_call_operand.vmem [shape: f32[64,128], index: 2, kind: input, shape index: {}]
  %s3 = inlined_call_operand.hbm [shape: f32[4,1,128], index: 3, kind: output, shape index: {}]
  %s4 = sld [smem:[#allocation0]]
  $region45: #{forward.1} parent=0
    _
  %s6 = ssub.s32 1, %s4
  %s7 = scalar_select 0, %s6, %s4
  $region1: #{forward.1} parent=0
    #allocation2 [shape = 'u8[1024]{0}', space=vmem, size = 0x400, scoped, tag = 'output window, operand 0']
    #allocation3 [shape = 's32[2]{0}', space=sflag, size = 0x8, scoped, tag = 'scoped memory for forward.1']
    %8 = vsyncpa [#allocation3], 0
    %s9 = scalar_lea.sflag [#allocation3], 1
    %10 = vsyncpa %s9, 0
    loop: start=0, step=1, limit=6
    $region2: #{forward.1} parent=1 // loop_pre_header
      _
    $region3: #{forward.1} parent=1 // loop_header
      %s12 = sphi 0, %s16
      %p13 = scmp.ge.s32.totalorder %s12, 6
      %s22 = sphi 0, %s24
      %s25 = sphi 0, %s22
      %s26 = sphi 0, %s25
      %s42 = sphi 0, %s26
      %s48 = sphi 0, %s50
      %s51 = sphi 0, %s48
      %s52 = sphi 0, %s51
      %s68 = sphi 0, %s52
      %s72 = sphi 0, %s72
      %s74 = sphi 0, %s72
      %s75 = sphi 0, %s74
      %s89 = sphi 0, %s75
      %s95 = sphi 0, %s97
      %s98 = sphi 0, %s95
      %s99 = sphi 0, %s98
      %s115 = sphi 0, %s99
    $region4: #{forward.1} parent=1 // loop_header_branch
      %15 = sbr.rel (%p13) target = $region8
    $region5: #{forward.1} parent=1 // loop_body
      %s17 = ssub.s32 %s12, 1
      %s18 = ssub.s32 %s12, 2
      %s19 = sadd.s32 %s12, 1
      %s20 = ssub.s32 %s12, %s19
      %p21 = scmp.eq.s32.totalorder %s20, 0
      %s23 = sadd.s32 %s22, 1
      %s24 = scalar_select %p21, %s22, %s23
      %p27 = pneg %p21
      %p28 = scmp.eq.s32.totalorder %s12, 3
      %p29 = por %p27, %p28
      %p30 = scmp.ne.s32.totalorder %s22, %s25
      %p31 = scmp.eq.s32.totalorder %s12, 0
      %p32 = por %p30, %p31
      %p33 = scmp.ne.s32.totalorder %s22, %s25
      %p34 = scmp.eq.s32.totalorder %s17, 3
      %p35 = por %p33, %p34
      %p36 = scmp.ne.s32.totalorder %s25, %s26
      %p37 = scmp.eq.s32.totalorder %s17, 0
      %p38 = por %p36, %p37
      %p39 = scmp.ne.s32.totalorder %s25, %s26
      %p40 = scmp.eq.s32.totalorder %s18, 3
      %p41 = por %p39, %p40
      %p43 = scmp.ne.s32.totalorder %s26, %s42
      %p44 = scmp.eq.s32.totalorder %s18, 0
      %p45 = por %p43, %p44
      %s46 = ssub.s32 %s12, %s19
      %p47 = scmp.eq.s32.totalorder %s46, 0
      %s49 = sadd.s32 %s48, 1
      %s50 = scalar_select %p47, %s48, %s49
      %p53 = pneg %p47
      %p54 = scmp.eq.s32.totalorder %s12, 3
      %p55 = por %p53, %p54
      %p56 = scmp.ne.s32.totalorder %s48, %s51
      %p57 = scmp.eq.s32.totalorder %s12, 0
      %p58 = por %p56, %p57
      %p59 = scmp.ne.s32.totalorder %s48, %s51
      %p60 = scmp.eq.s32.totalorder %s17, 3
      %p61 = por %p59, %p60
      %p62 = scmp.ne.s32.totalorder %s51, %s52
      %p63 = scmp.eq.s32.totalorder %s17, 0
      %p64 = por %p62, %p63
      %p65 = scmp.ne.s32.totalorder %s51, %s52
      %p66 = scmp.eq.s32.totalorder %s18, 3
      %p67 = por %p65, %p66
      %p69 = scmp.ne.s32.totalorder %s52, %s68
      %p70 = scmp.eq.s32.totalorder %s18, 0
      %p71 = por %p69, %p70
      %s73 = sadd.s32 %s72, 1
      %p76 = scmp.eq.s32.totalorder %s12, 3
      %p77 = scmp.ne.s32.totalorder %s72, %s74
      %p78 = scmp.eq.s32.totalorder %s12, 0
      %p79 = por %p77, %p78
      %p80 = scmp.ne.s32.totalorder %s72, %s74
      %p81 = scmp.eq.s32.totalorder %s17, 3
      %p82 = por %p80, %p81
      %p83 = scmp.ne.s32.totalorder %s74, %s75
      %p84 = scmp.eq.s32.totalorder %s17, 0
      %p85 = por %p83, %p84
      %p86 = scmp.ne.s32.totalorder %s74, %s75
      %p87 = scmp.eq.s32.totalorder %s18, 3
      %p88 = por %p86, %p87
      %p90 = scmp.ne.s32.totalorder %s75, %s89
      %p91 = scmp.eq.s32.totalorder %s18, 0
      %p92 = por %p90, %p91
      %s93 = ssub.s32 %s12, %s19
      %p94 = scmp.eq.s32.totalorder %s93, 0
      %s96 = sadd.s32 %s95, 1
      %s97 = scalar_select %p94, %s95, %s96
      %p100 = pneg %p94
      %p101 = scmp.eq.s32.totalorder %s12, 3
      %p102 = por %p100, %p101
      %p103 = scmp.ne.s32.totalorder %s95, %s98
      %p104 = scmp.eq.s32.totalorder %s12, 0
      %p105 = por %p103, %p104
      %p106 = scmp.ne.s32.totalorder %s95, %s98
      %p107 = scmp.eq.s32.totalorder %s17, 3
      %p108 = por %p106, %p107
      %p109 = scmp.ne.s32.totalorder %s98, %s99
      %p110 = scmp.eq.s32.totalorder %s17, 0
      %p111 = por %p109, %p110
      %p112 = scmp.ne.s32.totalorder %s98, %s99
      %p113 = scmp.eq.s32.totalorder %s18, 3
      %p114 = por %p112, %p113
      %p116 = scmp.ne.s32.totalorder %s99, %s115
      %p117 = scmp.eq.s32.totalorder %s18, 0
      %p118 = por %p116, %p117
      %p119 = scmp.le.s32.totalorder 1, %s12
      %p120 = scmp.lt.s32.totalorder %s12, 5
      %p121 = pnand %p119, %p120
      %p122 = pneg %p121
      // Predicated region
      $region9: #{forward.1} parent=5 // pred_check
        _
      $region10: #{forward.1} parent=5 // pred_check_branch
        %124 = sbr.rel (%p121) target = $region12
      $region11: #{forward.1} parent=5 // pred_region
        %s125 = ssub.s32 %s12, 1
        // Predicated region
        $region13: #{forward.1} parent=11 // pred_check
          %p126 = pneg %p85
        $region14: #{forward.1} parent=11 // pred_check_branch
          %128 = sbr.rel (%p126) target = $region16
        $region15: #{forward.1} parent=11 // pred_region
          _
        $region16: #{forward.1} parent=11 // pred_fallthru
          _
      $region12: #{forward.1} parent=5 // pred_fallthru
        _
      %p129 = scmp.lt.s32.totalorder %s12, 4
      // Predicated region
      $region17: #{forward.1} parent=5 // pred_check
        %p130 = pneg %p129
      $region18: #{forward.1} parent=5 // pred_check_branch
        %132 = sbr.rel (%p130) target = $region20
      $region19: #{forward.1} parent=5 // pred_region
        // Predicated region
        $region21: #{forward.1} parent=19 // pred_check
          %p133 = pneg %p32
        $region22: #{forward.1} parent=19 // pred_check_branch
          %135 = sbr.rel (%p133) target = $region24
        $region23: #{forward.1} parent=19 // pred_region
          %s136 = smul.u32 16, %s12
          %p137 = scmp.lt.s32.totalorder %s136, 63
          %s138 = scalar_select %p137, %s136, 63
          %s139 = smul.addr %s138, 8
          %s140 = scalar_lea.vmem %s0, %s139
          %s141 = smul.u32 16, %s12
        $region24: #{forward.1} parent=19 // pred_fallthru
          _
        // Predicated region
        $region25: #{forward.1} parent=19 // pred_check
          %p142 = pneg %p58
        $region26: #{forward.1} parent=19 // pred_check_branch
          %144 = sbr.rel (%p142) target = $region28
        $region27: #{forward.1} parent=19 // pred_region
          %s145 = smul.u32 16, %s12
          %p146 = scmp.lt.s32.totalorder %s145, 63
          %s147 = scalar_select %p146, %s145, 63
          %s148 = smul.addr %s147, 8
          %s149 = scalar_lea.vmem %s1, %s148
          %s150 = smul.u32 16, %s12
        $region28: #{forward.1} parent=19 // pred_fallthru
          _
      $region20: #{forward.1} parent=5 // pred_fallthru
        _
      %p151 = scmp.le.s32.totalorder 1, %s12
      %p152 = scmp.lt.s32.totalorder %s12, 5
      %p153 = pnand %p151, %p152
      %p154 = pneg %p153
      // Predicated region
      $region29: #{forward.1} parent=5 // pred_check
        _
      $region30: #{forward.1} parent=5 // pred_check_branch
        %156 = sbr.rel (%p153) target = $region32
      $region31: #{forward.1} parent=5 // pred_region
        %s157 = ssub.s32 %s12, 1
        %s158 = smul.u32 16, %s17
        %p159 = scmp.lt.s32.totalorder %s158, 63
        %s160 = scalar_select %p159, %s158, 63
        %s161 = smul.addr %s160, 8
        %s162 = scalar_lea.vmem %s0, %s161
        %p163 = pneg %p38
        %p164 = pneg %p35
        %s165 = smul.u32 16, %s17
        %p166 = scmp.lt.s32.totalorder %s165, 63
        %s167 = scalar_select %p166, %s165, 63
        %s168 = smul.addr %s167, 8
        %s169 = scalar_lea.vmem %s1, %s168
        %p170 = pneg %p64
        %p171 = pneg %p61
        %p172 = pneg %p85
        %p173 = pneg %p82
        %p174 = pneg %p111
        %p175 = pneg %p108
        %s176 = sand.u32 %s98, 1
        %s177 = scalar_lea.sflag [#allocation3], %s176
        %s178 = sand.u32 %s98, 1
        %s179 = scalar_lea.vmem [#allocation2], %s178
        %s180 = smul.u32 16, %s17
        %p181 = scmp.lt.s32.totalorder %s180, 63
        %s182 = scalar_select %p181, %s180, 63
        %s183 = smul.addr %s182, 8
        %s184 = scalar_lea.vmem %s0, %s183
        %s185 = smul.u32 16, %s17
        %s186 = smul.u32 16, %s17
        %p187 = scmp.lt.s32.totalorder %s186, 63
        %s188 = scalar_select %p187, %s186, 63
        %s189 = smul.addr %s188, 8
        %s190 = scalar_lea.vmem %s1, %s189
        %s191 = smul.u32 16, %s17
        %v192 = vld [vmem:[%s184] sm:$0xff]
        %v193 = vld [vmem:[%s184 + $0x8] sm:$0xff]
        %v194 = vld [vmem:[%s184 + $0x10] sm:$0xff]
        %v195 = vld [vmem:[%s184 + $0x18] sm:$0xff]
        %v196 = vld [vmem:[%s184 + $0x20] sm:$0xff]
        %v197 = vld [vmem:[%s184 + $0x28] sm:$0xff]
        %v198 = vld [vmem:[%s184 + $0x30] sm:$0xff]
        %v199 = vld [vmem:[%s184 + $0x38] sm:$0xff]
        %v200 = vld [vmem:[%s184 + $0x40] sm:$0xff]
        %v201 = vld [vmem:[%s184 + $0x48] sm:$0xff]
        %v202 = vld [vmem:[%s184 + $0x50] sm:$0xff]
        %v203 = vld [vmem:[%s184 + $0x58] sm:$0xff]
        %v204 = vld [vmem:[%s184 + $0x60] sm:$0xff]
        %v205 = vld [vmem:[%s184 + $0x68] sm:$0xff]
        %v206 = vld [vmem:[%s184 + $0x70] sm:$0xff]
        %v207 = vld [vmem:[%s184 + $0x78] sm:$0xff]
        %v208 = vld [vmem:[%s190] sm:$0xff]
        %v209 = vld [vmem:[%s190 + $0x8] sm:$0xff]
        %v210 = vld [vmem:[%s190 + $0x10] sm:$0xff]
        %v211 = vld [vmem:[%s190 + $0x18] sm:$0xff]
        %v212 = vld [vmem:[%s190 + $0x20] sm:$0xff]
        %v213 = vld [vmem:[%s190 + $0x28] sm:$0xff]
        %v214 = vld [vmem:[%s190 + $0x30] sm:$0xff]
        %v215 = vld [vmem:[%s190 + $0x38] sm:$0xff]
        %v216 = vld [vmem:[%s190 + $0x40] sm:$0xff]
        %v217 = vld [vmem:[%s190 + $0x48] sm:$0xff]
        %v218 = vld [vmem:[%s190 + $0x50] sm:$0xff]
        %v219 = vld [vmem:[%s190 + $0x58] sm:$0xff]
        %v220 = vld [vmem:[%s190 + $0x60] sm:$0xff]
        %v221 = vld [vmem:[%s190 + $0x68] sm:$0xff]
        %v222 = vld [vmem:[%s190 + $0x70] sm:$0xff]
        %v223 = vld [vmem:[%s190 + $0x78] sm:$0xff]
        %v224 = vld [vmem:[%s2] sm:$0x1]
        %v225 = vld [vmem:[%s2 + $0x1] sm:$0x1]
        %v226 = vld [vmem:[%s2 + $0x2] sm:$0x1]
        %v227 = vld [vmem:[%s2 + $0x3] sm:$0x1]
        %v228 = vld [vmem:[%s2 + $0x4] sm:$0x1]
        %v229 = vld [vmem:[%s2 + $0x5] sm:$0x1]
        %v230 = vld [vmem:[%s2 + $0x6] sm:$0x1]
        %v231 = vld [vmem:[%s2 + $0x7] sm:$0x1]
        %v232 = vld [vmem:[%s2 + $0x8] sm:$0xff]
        %v233 = vld [vmem:[%s2 + $0x10] sm:$0xff]
        %v234 = vld [vmem:[%s2 + $0x18] sm:$0xff]
        %v235 = vld [vmem:[%s2 + $0x20] sm:$0xff]
        %v236 = vld [vmem:[%s2 + $0x28] sm:$0xff]
        %v237 = vld [vmem:[%s2 + $0x30] sm:$0xff]
        %v238 = vld [vmem:[%s2 + $0x38] sm:$0xff]
        %vm239 = vcmask 130048
        %v240 = vsel %vm239, %v192, 0.0
        %v241 = vsel %vm239, %v193, 0.0
        %v242 = vadd.f32 %v240, %v241
        %v243 = vsel %vm239, %v194, 0.0
        %v244 = vadd.f32 %v242, %v243
        %v245 = vsel %vm239, %v195, 0.0
        %v246 = vadd.f32 %v244, %v245
        %v247 = vsel %vm239, %v196, 0.0
        %v248 = vadd.f32 %v246, %v247
        %v249 = vsel %vm239, %v197, 0.0
        %v250 = vadd.f32 %v248, %v249
        %v251 = vsel %vm239, %v198, 0.0
        %v252 = vadd.f32 %v250, %v251
        %v253 = vsel %vm239, %v199, 0.0
        %v254 = vadd.f32 %v252, %v253
        %v255 = vsel %vm239, %v200, 0.0
        %v256 = vadd.f32 %v254, %v255
        %v257 = vsel %vm239, %v201, 0.0
        %v258 = vadd.f32 %v256, %v257
        %v259 = vsel %vm239, %v202, 0.0
        %v260 = vadd.f32 %v258, %v259
        %v261 = vsel %vm239, %v203, 0.0
        %v262 = vadd.f32 %v260, %v261
        %v263 = vsel %vm239, %v204, 0.0
        %v264 = vadd.f32 %v262, %v263
        %v265 = vsel %vm239, %v205, 0.0
        %v266 = vadd.f32 %v264, %v265
        %v267 = vsel %vm239, %v206, 0.0
        %v268 = vadd.f32 %v266, %v267
        %v269 = vsel %vm239, %v207, 0.0
        %v270 = vadd.f32 %v268, %v269
        %v271 = vrot.slane %v270, 4
        %v272 = vadd.f32 %v270, %v271
        %v273 = vrot.slane %v272, 2
        %v274 = vadd.f32 %v272, %v273
        %v275 = vrot.slane %v274, 1
        %v276 = vadd.f32 %v274, %v275
        %v277 = vmul.f32 %v276, 0.0078125
        %v278 = vmul.f32 %v192, %v192
        %v279 = vmul.f32 %v193, %v193
        %v280 = vmul.f32 %v194, %v194
        %v281 = vmul.f32 %v195, %v195
        %v282 = vmul.f32 %v196, %v196
        %v283 = vmul.f32 %v197, %v197
        %v284 = vmul.f32 %v198, %v198
        %v285 = vmul.f32 %v199, %v199
        %v286 = vmul.f32 %v200, %v200
        %v287 = vmul.f32 %v201, %v201
        %v288 = vmul.f32 %v202, %v202
        %v289 = vmul.f32 %v203, %v203
        %v290 = vmul.f32 %v204, %v204
        %v291 = vmul.f32 %v205, %v205
        %v292 = vmul.f32 %v206, %v206
        %v293 = vmul.f32 %v207, %v207
        %v294 = vsel %vm239, %v278, 0.0
        %v295 = vsel %vm239, %v279, 0.0
        %v296 = vadd.f32 %v294, %v295
        %v297 = vsel %vm239, %v280, 0.0
        %v298 = vadd.f32 %v296, %v297
        %v299 = vsel %vm239, %v281, 0.0
        %v300 = vadd.f32 %v298, %v299
        %v301 = vsel %vm239, %v282, 0.0
        %v302 = vadd.f32 %v300, %v301
        %v303 = vsel %vm239, %v283, 0.0
        %v304 = vadd.f32 %v302, %v303
        %v305 = vsel %vm239, %v284, 0.0
        %v306 = vadd.f32 %v304, %v305
        %v307 = vsel %vm239, %v285, 0.0
        %v308 = vadd.f32 %v306, %v307
        %v309 = vsel %vm239, %v286, 0.0
        %v310 = vadd.f32 %v308, %v309
        %v311 = vsel %vm239, %v287, 0.0
        %v312 = vadd.f32 %v310, %v311
        %v313 = vsel %vm239, %v288, 0.0
        %v314 = vadd.f32 %v312, %v313
        %v315 = vsel %vm239, %v289, 0.0
        %v316 = vadd.f32 %v314, %v315
        %v317 = vsel %vm239, %v290, 0.0
        %v318 = vadd.f32 %v316, %v317
        %v319 = vsel %vm239, %v291, 0.0
        %v320 = vadd.f32 %v318, %v319
        %v321 = vsel %vm239, %v292, 0.0
        %v322 = vadd.f32 %v320, %v321
        %v323 = vsel %vm239, %v293, 0.0
        %v324 = vadd.f32 %v322, %v323
        %v325 = vrot.slane %v324, 4
        %v326 = vadd.f32 %v324, %v325
        %v327 = vrot.slane %v326, 2
        %v328 = vadd.f32 %v326, %v327
        %v329 = vrot.slane %v328, 1
        %v330 = vadd.f32 %v328, %v329
        %v331 = vmul.f32 %v330, 0.0078125
        %v332 = vmul.f32 %v277, %v277
        %v333 = vsub.f32 %v331, %v332
        %v334 = vmax.f32 %v333, 0.0
        %v335 = vadd.f32 %v334, 1e-05
        %v336 = vrsqrt.pop %v335
        %v337 = vmul.f32 %v224, %v336
        %v338 = vlaneseq
        %v339 = vshrl.u32 %v338, 7
        %v340 = vsub.s32 0, %v339
        %v341 = vrot.slane %v337, %v340
        %v342 = vmul.f32 %v192, %v341
        %v343 = vmul.f32 %v193, %v341
        %v344 = vmul.f32 %v194, %v341
        %v345 = vmul.f32 %v195, %v341
        %v346 = vmul.f32 %v196, %v341
        %v347 = vmul.f32 %v197, %v341
        %v348 = vmul.f32 %v198, %v341
        %v349 = vmul.f32 %v199, %v341
        %v350 = vmul.f32 %v200, %v341
        %v351 = vmul.f32 %v201, %v341
        %v352 = vmul.f32 %v202, %v341
        %v353 = vmul.f32 %v203, %v341
        %v354 = vmul.f32 %v204, %v341
        %v355 = vmul.f32 %v205, %v341
        %v356 = vmul.f32 %v206, %v341
        %v357 = vmul.f32 %v207, %v341
        %v358 = vmul.f32 %v277, %v337
        %v359 = vsub.f32 %v225, %v358
        %v360 = vlaneseq
        %v361 = vshrl.u32 %v360, 7
        %v362 = vsub.s32 0, %v361
        %v363 = vrot.slane %v359, %v362
        %v364 = vadd.f32 %v342, %v363
        %v365 = vadd.f32 %v343, %v363
        %v366 = vadd.f32 %v344, %v363
        %v367 = vadd.f32 %v345, %v363
        %v368 = vadd.f32 %v346, %v363
        %v369 = vadd.f32 %v347, %v363
        %v370 = vadd.f32 %v348, %v363
        %v371 = vadd.f32 %v349, %v363
        %v372 = vadd.f32 %v350, %v363
        %v373 = vadd.f32 %v351, %v363
        %v374 = vadd.f32 %v352, %v363
        %v375 = vadd.f32 %v353, %v363
        %v376 = vadd.f32 %v354, %v363
        %v377 = vadd.f32 %v355, %v363
        %v378 = vadd.f32 %v356, %v363
        %v379 = vadd.f32 %v357, %v363
        %v380 = vlaneseq
        %v381 = vshrl.u32 %v380, 7
        %v382 = vsub.s32 0, %v381
        %v383 = vrot.slane %v226, %v382
        %v385 = vsel %vm239, %v364, 0
        %v388 = vsel %vm239, %v365, 0
        %v391 = vsel %vm239, %v366, 0
        %v394 = vsel %vm239, %v367, 0
        %v397 = vsel %vm239, %v368, 0
        %v400 = vsel %vm239, %v369, 0
        %v403 = vsel %vm239, %v370, 0
        %v406 = vsel %vm239, %v371, 0
        %v409 = vsel %vm239, %v372, 0
        %v412 = vsel %vm239, %v373, 0
        %v415 = vsel %vm239, %v374, 0
        %v418 = vsel %vm239, %v375, 0
        %v421 = vsel %vm239, %v376, 0
        %v424 = vsel %vm239, %v377, 0
        %v427 = vsel %vm239, %v378, 0
        %v430 = vsel %vm239, %v379, 0
        %432 = vmatprep.subr.mxu0 0.0
        %433 = vmatpush1.msra.mxu0 0.0
        %434 = vmatprep.subr.mxu0 0.0
        %435 = vmatpush1.msra.mxu0 0.0
        %436 = vmatprep.subr.mxu0 0.0
        %437 = vmatpush1.msra.mxu0 0.0
        %438 = vmatprep.subr.mxu0 0.0
        %439 = vmatpush1.msra.mxu0 0.0
        %440 = vmatprep.subr.mxu0 0.0
        %441 = vmatpush1.msra.mxu0 0.0
        %442 = vmatprep.subr.mxu0 0.0
        %443 = vmatpush1.msra.mxu0 0.0
        %444 = vmatprep.subr.mxu0 0.0
        %445 = vmatpush1.msra.mxu0 0.0
        %446 = vmatprep.subr.mxu0 0.0
        %447 = vmatpush1.msra.mxu0 0.0
        %448 = vmatprep.subr.mxu0 0.0
        %449 = vmatpush1.msra.mxu0 0.0
        %450 = vmatprep.subr.mxu0 0.0
        %451 = vmatpush1.msra.mxu0 0.0
        %452 = vmatprep.subr.mxu0 0.0
        %453 = vmatpush1.msra.mxu0 0.0
        %454 = vmatprep.subr.mxu0 0.0
        %455 = vmatpush1.msra.mxu0 0.0
        %456 = vmatprep.subr.mxu0 0.0
        %457 = vmatpush1.msra.mxu0 0.0
        %458 = vmatprep.subr.mxu0 0.0
        %459 = vmatpush1.msra.mxu0 0.0
        %460 = vmatprep.subr.mxu0 0.0
        %461 = vmatpush1.msra.mxu0 %v233
        %462 = vmatprep.subr.mxu0 0.0
        %463 = vmatpush1.msra.mxu0 %v232
        %464 = vmatprep.subr.mxu0 0.0
        %465 = vmatpush2.msra.mxu0 0.0
        %466 = vmatprep.subr.mxu0 0.0
        %467 = vmatpush2.msra.mxu0 0.0
        %468 = vmatprep.subr.mxu0 0.0
        %469 = vmatpush2.msra.mxu0 0.0
        %470 = vmatprep.subr.mxu0 0.0
        %471 = vmatpush2.msra.mxu0 0.0
        %472 = vmatprep.subr.mxu0 0.0
        %473 = vmatpush2.msra.mxu0 0.0
        %474 = vmatprep.subr.mxu0 0.0
        %475 = vmatpush2.msra.mxu0 0.0
        %476 = vmatprep.subr.mxu0 0.0
        %477 = vmatpush2.msra.mxu0 0.0
        %478 = vmatprep.subr.mxu0 0.0
        %479 = vmatpush2.msra.mxu0 0.0
        %480 = vmatprep.subr.mxu0 0.0
        %481 = vmatpush2.msra.mxu0 0.0
        %482 = vmatprep.subr.mxu0 0.0
        %483 = vmatpush2.msra.mxu0 0.0
        %484 = vmatprep.subr.mxu0 0.0
        %485 = vmatpush2.msra.mxu0 0.0
        %486 = vmatprep.subr.mxu0 0.0
        %487 = vmatpush2.msra.mxu0 0.0
        %488 = vmatprep.subr.mxu0 0.0
        %489 = vmatpush2.msra.mxu0 0.0
        %490 = vmatprep.subr.mxu0 0.0
        %491 = vmatpush2.msra.mxu0 0.0
        %492 = vmatprep.subr.mxu0 0.0
        %493 = vmatpush2.msra.mxu0 0.0
        %494 = vmatprep.subr.mxu0 0.0
        %495 = vmatpush2.msra.mxu0 0.0
        %496 = vmatprep.mubr.f32.mxu0 0.0
        %497 = vmatmul.mubr.f32.gmra.mxu0 %v385
        %v498 = vpop.f32.mrf.mxu0
        %v499 = vadd.f32 %v383, %v498
        %v500 = vpop.f32.mrf.mxu0
        %501 = vmatprep.mubr.f32.mxu0 0.0
        %502 = vmatmul.mubr.f32.gmra.mxu0 %v388
        %v503 = vpop.f32.mrf.mxu0
        %v504 = vadd.f32 %v383, %v503
        %v505 = vpop.f32.mrf.mxu0
        %506 = vmatprep.mubr.f32.mxu0 0.0
        %507 = vmatmul.mubr.f32.gmra.mxu0 %v391
        %v508 = vpop.f32.mrf.mxu0
        %v509 = vadd.f32 %v383, %v508
        %v510 = vpop.f32.mrf.mxu0
        %511 = vmatprep.mubr.f32.mxu0 0.0
        %512 = vmatmul.mubr.f32.gmra.mxu0 %v394
        %v513 = vpop.f32.mrf.mxu0
        %v514 = vadd.f32 %v383, %v513
        %v515 = vpop.f32.mrf.mxu0
        %516 = vmatprep.mubr.f32.mxu0 0.0
        %517 = vmatmul.mubr.f32.gmra.mxu0 %v397
        %v518 = vpop.f32.mrf.mxu0
        %v519 = vadd.f32 %v383, %v518
        %v520 = vpop.f32.mrf.mxu0
        %521 = vmatprep.mubr.f32.mxu0 0.0
        %522 = vmatmul.mubr.f32.gmra.mxu0 %v400
        %v523 = vpop.f32.mrf.mxu0
        %v524 = vadd.f32 %v383, %v523
        %v525 = vpop.f32.mrf.mxu0
        %526 = vmatprep.mubr.f32.mxu0 0.0
        %527 = vmatmul.mubr.f32.gmra.mxu0 %v403
        %v528 = vpop.f32.mrf.mxu0
        %v529 = vadd.f32 %v383, %v528
        %v530 = vpop.f32.mrf.mxu0
        %531 = vmatprep.mubr.f32.mxu0 0.0
        %532 = vmatmul.mubr.f32.gmra.mxu0 %v406
        %v533 = vpop.f32.mrf.mxu0
        %v534 = vadd.f32 %v383, %v533
        %v535 = vpop.f32.mrf.mxu0
        %536 = vmatprep.mubr.f32.mxu0 0.0
        %537 = vmatmul.mubr.f32.gmra.mxu0 %v409
        %v538 = vpop.f32.mrf.mxu0
        %v539 = vadd.f32 %v383, %v538
        %v540 = vpop.f32.mrf.mxu0
        %541 = vmatprep.mubr.f32.mxu0 0.0
        %542 = vmatmul.mubr.f32.gmra.mxu0 %v412
        %v543 = vpop.f32.mrf.mxu0
        %v544 = vadd.f32 %v383, %v543
        %v545 = vpop.f32.mrf.mxu0
        %546 = vmatprep.mubr.f32.mxu0 0.0
        %547 = vmatmul.mubr.f32.gmra.mxu0 %v415
        %v548 = vpop.f32.mrf.mxu0
        %v549 = vadd.f32 %v383, %v548
        %v550 = vpop.f32.mrf.mxu0
        %551 = vmatprep.mubr.f32.mxu0 0.0
        %552 = vmatmul.mubr.f32.gmra.mxu0 %v418
        %v553 = vpop.f32.mrf.mxu0
        %v554 = vadd.f32 %v383, %v553
        %v555 = vpop.f32.mrf.mxu0
        %556 = vmatprep.mubr.f32.mxu0 0.0
        %557 = vmatmul.mubr.f32.gmra.mxu0 %v421
        %v558 = vpop.f32.mrf.mxu0
        %v559 = vadd.f32 %v383, %v558
        %v560 = vpop.f32.mrf.mxu0
        %561 = vmatprep.mubr.f32.mxu0 0.0
        %562 = vmatmul.mubr.f32.gmra.mxu0 %v424
        %v563 = vpop.f32.mrf.mxu0
        %v564 = vadd.f32 %v383, %v563
        %v565 = vpop.f32.mrf.mxu0
        %566 = vmatprep.mubr.f32.mxu0 0.0
        %567 = vmatmul.mubr.f32.gmra.mxu0 %v427
        %v568 = vpop.f32.mrf.mxu0
        %v569 = vadd.f32 %v383, %v568
        %v570 = vpop.f32.mrf.mxu0
        %571 = vmatprep.mubr.f32.mxu0 0.0
        %572 = vmatmul.mubr.f32.gmra.mxu0 %v430
        %v573 = vpop.f32.mrf.mxu0
        %v574 = vadd.f32 %v383, %v573
        %v575 = vpop.f32.mrf.mxu0
        %576 = vdwg.mxu0
        %v577 = vmax.f32 %v499, 0.0
        %v578 = vmax.f32 %v504, 0.0
        %v579 = vmax.f32 %v509, 0.0
        %v580 = vmax.f32 %v514, 0.0
        %v581 = vmax.f32 %v519, 0.0
        %v582 = vmax.f32 %v524, 0.0
        %v583 = vmax.f32 %v529, 0.0
        %v584 = vmax.f32 %v534, 0.0
        %v585 = vmax.f32 %v539, 0.0
        %v586 = vmax.f32 %v544, 0.0
        %v587 = vmax.f32 %v549, 0.0
        %v588 = vmax.f32 %v554, 0.0
        %v589 = vmax.f32 %v559, 0.0
        %v590 = vmax.f32 %v564, 0.0
        %v591 = vmax.f32 %v569, 0.0
        %v592 = vmax.f32 %v574, 0.0
        %vm593 = vcmask 261120
        %v594 = vsel %vm593, %v577, 0.0
        %v595 = vsel %vm593, %v578, 0.0
        %v596 = vadd.f32 %v594, %v595
        %v597 = vsel %vm593, %v579, 0.0
        %v598 = vadd.f32 %v596, %v597
        %v599 = vsel %vm593, %v580, 0.0
        %v600 = vadd.f32 %v598, %v599
        %v601 = vsel %vm593, %v581, 0.0
        %v602 = vadd.f32 %v600, %v601
        %v603 = vsel %vm593, %v582, 0.0
        %v604 = vadd.f32 %v602, %v603
        %v605 = vsel %vm593, %v583, 0.0
        %v606 = vadd.f32 %v604, %v605
        %v607 = vsel %vm593, %v584, 0.0
        %v608 = vadd.f32 %v606, %v607
        %v609 = vsel %vm593, %v585, 0.0
        %v610 = vadd.f32 %v608, %v609
        %v611 = vsel %vm593, %v586, 0.0
        %v612 = vadd.f32 %v610, %v611
        %v613 = vsel %vm593, %v587, 0.0
        %v614 = vadd.f32 %v612, %v613
        %v615 = vsel %vm593, %v588, 0.0
        %v616 = vadd.f32 %v614, %v615
        %v617 = vsel %vm593, %v589, 0.0
        %v618 = vadd.f32 %v616, %v617
        %v619 = vsel %vm593, %v590, 0.0
        %v620 = vadd.f32 %v618, %v619
        %v621 = vsel %vm593, %v591, 0.0
        %v622 = vadd.f32 %v620, %v621
        %v623 = vsel %vm593, %v592, 0.0
        %v624 = vadd.f32 %v622, %v623
        %v625 = vrot.slane %v624, 4
        %v626 = vadd.f32 %v624, %v625
        %v627 = vrot.slane %v626, 2
        %v628 = vadd.f32 %v626, %v627
        %v629 = vrot.slane %v628, 1
        %v630 = vadd.f32 %v628, %v629
        %v631 = vmul.f32 %v630, 0.0078125
        %v632 = vmul.f32 %v577, %v577
        %v633 = vmul.f32 %v578, %v578
        %v634 = vmul.f32 %v579, %v579
        %v635 = vmul.f32 %v580, %v580
        %v636 = vmul.f32 %v581, %v581
        %v637 = vmul.f32 %v582, %v582
        %v638 = vmul.f32 %v583, %v583
        %v639 = vmul.f32 %v584, %v584
        %v640 = vmul.f32 %v585, %v585
        %v641 = vmul.f32 %v586, %v586
        %v642 = vmul.f32 %v587, %v587
        %v643 = vmul.f32 %v588, %v588
        %v644 = vmul.f32 %v589, %v589
        %v645 = vmul.f32 %v590, %v590
        %v646 = vmul.f32 %v591, %v591
        %v647 = vmul.f32 %v592, %v592
        %v648 = vsel %vm593, %v632, 0.0
        %v649 = vsel %vm593, %v633, 0.0
        %v650 = vadd.f32 %v648, %v649
        %v651 = vsel %vm593, %v634, 0.0
        %v652 = vadd.f32 %v650, %v651
        %v653 = vsel %vm593, %v635, 0.0
        %v654 = vadd.f32 %v652, %v653
        %v655 = vsel %vm593, %v636, 0.0
        %v656 = vadd.f32 %v654, %v655
        %v657 = vsel %vm593, %v637, 0.0
        %v658 = vadd.f32 %v656, %v657
        %v659 = vsel %vm593, %v638, 0.0
        %v660 = vadd.f32 %v658, %v659
        %v661 = vsel %vm593, %v639, 0.0
        %v662 = vadd.f32 %v660, %v661
        %v663 = vsel %vm593, %v640, 0.0
        %v664 = vadd.f32 %v662, %v663
        %v665 = vsel %vm593, %v641, 0.0
        %v666 = vadd.f32 %v664, %v665
        %v667 = vsel %vm593, %v642, 0.0
        %v668 = vadd.f32 %v666, %v667
        %v669 = vsel %vm593, %v643, 0.0
        %v670 = vadd.f32 %v668, %v669
        %v671 = vsel %vm593, %v644, 0.0
        %v672 = vadd.f32 %v670, %v671
        %v673 = vsel %vm593, %v645, 0.0
        %v674 = vadd.f32 %v672, %v673
        %v675 = vsel %vm593, %v646, 0.0
        %v676 = vadd.f32 %v674, %v675
        %v677 = vsel %vm593, %v647, 0.0
        %v678 = vadd.f32 %v676, %v677
        %v679 = vrot.slane %v678, 4
        %v680 = vadd.f32 %v678, %v679
        %v681 = vrot.slane %v680, 2
        %v682 = vadd.f32 %v680, %v681
        %v683 = vrot.slane %v682, 1
        %v684 = vadd.f32 %v682, %v683
        %v685 = vmul.f32 %v684, 0.0078125
        %v686 = vmul.f32 %v631, %v631
        %v687 = vsub.f32 %v685, %v686
        %v688 = vmax.f32 %v687, 0.0
        %v689 = vadd.f32 %v688, 1e-05
        %v690 = vrsqrt.pop %v689
        %v691 = vmul.f32 %v227, %v690
        %v692 = vlaneseq
        %v693 = vshrl.u32 %v692, 7
        %v694 = vsub.s32 0, %v693
        %v695 = vrot.slane %v691, %v694
        %v696 = vmul.f32 %v577, %v695
        %v697 = vmul.f32 %v578, %v695
        %v698 = vmul.f32 %v579, %v695
        %v699 = vmul.f32 %v580, %v695
        %v700 = vmul.f32 %v581, %v695
        %v701 = vmul.f32 %v582, %v695
        %v702 = vmul.f32 %v583, %v695
        %v703 = vmul.f32 %v584, %v695
        %v704 = vmul.f32 %v585, %v695
        %v705 = vmul.f32 %v586, %v695
        %v706 = vmul.f32 %v587, %v695
        %v707 = vmul.f32 %v588, %v695
        %v708 = vmul.f32 %v589, %v695
        %v709 = vmul.f32 %v590, %v695
        %v710 = vmul.f32 %v591, %v695
        %v711 = vmul.f32 %v592, %v695
        %v712 = vmul.f32 %v631, %v691
        %v713 = vsub.f32 %v228, %v712
        %v714 = vlaneseq
        %v715 = vshrl.u32 %v714, 7
        %v716 = vsub.s32 0, %v715
        %v717 = vrot.slane %v713, %v716
        %v718 = vadd.f32 %v696, %v717
        %v719 = vadd.f32 %v697, %v717
        %v720 = vadd.f32 %v698, %v717
        %v721 = vadd.f32 %v699, %v717
        %v722 = vadd.f32 %v700, %v717
        %v723 = vadd.f32 %v701, %v717
        %v724 = vadd.f32 %v702, %v717
        %v725 = vadd.f32 %v703, %v717
        %v726 = vadd.f32 %v704, %v717
        %v727 = vadd.f32 %v705, %v717
        %v728 = vadd.f32 %v706, %v717
        %v729 = vadd.f32 %v707, %v717
        %v730 = vadd.f32 %v708, %v717
        %v731 = vadd.f32 %v709, %v717
        %v732 = vadd.f32 %v710, %v717
        %v733 = vadd.f32 %v711, %v717
        %vm734 = vcmask 64512
        %v736 = vsel %vm734, %v208, 0
        %v739 = vsel %vm734, %v209, 0
        %v742 = vsel %vm734, %v210, 0
        %v745 = vsel %vm734, %v211, 0
        %v748 = vsel %vm734, %v212, 0
        %v751 = vsel %vm734, %v213, 0
        %v754 = vsel %vm734, %v214, 0
        %v757 = vsel %vm734, %v215, 0
        %v760 = vsel %vm734, %v216, 0
        %v763 = vsel %vm734, %v217, 0
        %v766 = vsel %vm734, %v218, 0
        %v769 = vsel %vm734, %v219, 0
        %v772 = vsel %vm734, %v220, 0
        %v775 = vsel %vm734, %v221, 0
        %v778 = vsel %vm734, %v222, 0
        %v781 = vsel %vm734, %v223, 0
        %783 = vmatprep.subr.mxu0 0.0
        %784 = vmatpush1.msra.mxu0 0.0
        %785 = vmatprep.subr.mxu0 0.0
        %786 = vmatpush1.msra.mxu0 0.0
        %787 = vmatprep.subr.mxu0 0.0
        %788 = vmatpush1.msra.mxu0 0.0
        %789 = vmatprep.subr.mxu0 0.0
        %790 = vmatpush1.msra.mxu0 0.0
        %791 = vmatprep.subr.mxu0 0.0
        %792 = vmatpush1.msra.mxu0 0.0
        %793 = vmatprep.subr.mxu0 0.0
        %794 = vmatpush1.msra.mxu0 0.0
        %795 = vmatprep.subr.mxu0 0.0
        %796 = vmatpush1.msra.mxu0 0.0
        %797 = vmatprep.subr.mxu0 0.0
        %798 = vmatpush1.msra.mxu0 0.0
        %799 = vmatprep.subr.mxu0 0.0
        %800 = vmatpush1.msra.mxu0 0.0
        %801 = vmatprep.subr.mxu0 0.0
        %802 = vmatpush1.msra.mxu0 0.0
        %803 = vmatprep.subr.mxu0 0.0
        %804 = vmatpush1.msra.mxu0 0.0
        %805 = vmatprep.subr.mxu0 0.0
        %806 = vmatpush1.msra.mxu0 0.0
        %807 = vmatprep.subr.mxu0 0.0
        %808 = vmatpush1.msra.mxu0 0.0
        %809 = vmatprep.subr.mxu0 0.0
        %810 = vmatpush1.msra.mxu0 0.0
        %811 = vmatprep.subr.mxu0 0.0
        %812 = vmatpush1.msra.mxu0 0.0
        %813 = vmatprep.subr.mxu0 0.0
        %814 = vmatpush1.msra.mxu0 %v238
        %815 = vmatprep.subr.mxu0 0.0
        %816 = vmatpush2.msra.mxu0 0.0
        %817 = vmatprep.subr.mxu0 0.0
        %818 = vmatpush2.msra.mxu0 0.0
        %819 = vmatprep.subr.mxu0 0.0
        %820 = vmatpush2.msra.mxu0 0.0
        %821 = vmatprep.subr.mxu0 0.0
        %822 = vmatpush2.msra.mxu0 0.0
        %823 = vmatprep.subr.mxu0 0.0
        %824 = vmatpush2.msra.mxu0 0.0
        %825 = vmatprep.subr.mxu0 0.0
        %826 = vmatpush2.msra.mxu0 0.0
        %827 = vmatprep.subr.mxu0 0.0
        %828 = vmatpush2.msra.mxu0 0.0
        %829 = vmatprep.subr.mxu0 0.0
        %830 = vmatpush2.msra.mxu0 0.0
        %831 = vmatprep.subr.mxu0 0.0
        %832 = vmatpush2.msra.mxu0 0.0
        %833 = vmatprep.subr.mxu0 0.0
        %834 = vmatpush2.msra.mxu0 0.0
        %835 = vmatprep.subr.mxu0 0.0
        %836 = vmatpush2.msra.mxu0 0.0
        %837 = vmatprep.subr.mxu0 0.0
        %838 = vmatpush2.msra.mxu0 0.0
        %839 = vmatprep.subr.mxu0 0.0
        %840 = vmatpush2.msra.mxu0 0.0
        %841 = vmatprep.subr.mxu0 0.0
        %842 = vmatpush2.msra.mxu0 0.0
        %843 = vmatprep.subr.mxu0 0.0
        %844 = vmatpush2.msra.mxu0 0.0
        %845 = vmatprep.subr.mxu0 0.0
        %846 = vmatpush2.msra.mxu0 0.0
        %847 = vmatprep.mubr.f32.mxu0 0.0
        %848 = vmatmul.mubr.f32.gmra.mxu0 %v736
        %v849 = vpop.f32.mrf.mxu0
        %v850 = vadd.f32 0.0, %v849
        %v851 = vpop.f32.mrf.mxu0
        %852 = vmatprep.mubr.f32.mxu0 0.0
        %853 = vmatmul.mubr.f32.gmra.mxu0 %v739
        %v854 = vpop.f32.mrf.mxu0
        %v855 = vadd.f32 0.0, %v854
        %v856 = vpop.f32.mrf.mxu0
        %857 = vmatprep.mubr.f32.mxu0 0.0
        %858 = vmatmul.mubr.f32.gmra.mxu0 %v742
        %v859 = vpop.f32.mrf.mxu0
        %v860 = vadd.f32 0.0, %v859
        %v861 = vpop.f32.mrf.mxu0
        %862 = vmatprep.mubr.f32.mxu0 0.0
        %863 = vmatmul.mubr.f32.gmra.mxu0 %v745
        %v864 = vpop.f32.mrf.mxu0
        %v865 = vadd.f32 0.0, %v864
        %v866 = vpop.f32.mrf.mxu0
        %867 = vmatprep.mubr.f32.mxu0 0.0
        %868 = vmatmul.mubr.f32.gmra.mxu0 %v748
        %v869 = vpop.f32.mrf.mxu0
        %v870 = vadd.f32 0.0, %v869
        %v871 = vpop.f32.mrf.mxu0
        %872 = vmatprep.mubr.f32.mxu0 0.0
        %873 = vmatmul.mubr.f32.gmra.mxu0 %v751
        %v874 = vpop.f32.mrf.mxu0
        %v875 = vadd.f32 0.0, %v874
        %v876 = vpop.f32.mrf.mxu0
        %877 = vmatprep.mubr.f32.mxu0 0.0
        %878 = vmatmul.mubr.f32.gmra.mxu0 %v754
        %v879 = vpop.f32.mrf.mxu0
        %v880 = vadd.f32 0.0, %v879
        %v881 = vpop.f32.mrf.mxu0
        %882 = vmatprep.mubr.f32.mxu0 0.0
        %883 = vmatmul.mubr.f32.gmra.mxu0 %v757
        %v884 = vpop.f32.mrf.mxu0
        %v885 = vadd.f32 0.0, %v884
        %v886 = vpop.f32.mrf.mxu0
        %887 = vmatprep.mubr.f32.mxu0 0.0
        %888 = vmatmul.mubr.f32.gmra.mxu0 %v760
        %v889 = vpop.f32.mrf.mxu0
        %v890 = vadd.f32 0.0, %v889
        %v891 = vpop.f32.mrf.mxu0
        %892 = vmatprep.mubr.f32.mxu0 0.0
        %893 = vmatmul.mubr.f32.gmra.mxu0 %v763
        %v894 = vpop.f32.mrf.mxu0
        %v895 = vadd.f32 0.0, %v894
        %v896 = vpop.f32.mrf.mxu0
        %897 = vmatprep.mubr.f32.mxu0 0.0
        %898 = vmatmul.mubr.f32.gmra.mxu0 %v766
        %v899 = vpop.f32.mrf.mxu0
        %v900 = vadd.f32 0.0, %v899
        %v901 = vpop.f32.mrf.mxu0
        %902 = vmatprep.mubr.f32.mxu0 0.0
        %903 = vmatmul.mubr.f32.gmra.mxu0 %v769
        %v904 = vpop.f32.mrf.mxu0
        %v905 = vadd.f32 0.0, %v904
        %v906 = vpop.f32.mrf.mxu0
        %907 = vmatprep.mubr.f32.mxu0 0.0
        %908 = vmatmul.mubr.f32.gmra.mxu0 %v772
        %v909 = vpop.f32.mrf.mxu0
        %v910 = vadd.f32 0.0, %v909
        %v911 = vpop.f32.mrf.mxu0
        %912 = vmatprep.mubr.f32.mxu0 0.0
        %913 = vmatmul.mubr.f32.gmra.mxu0 %v775
        %v914 = vpop.f32.mrf.mxu0
        %v915 = vadd.f32 0.0, %v914
        %v916 = vpop.f32.mrf.mxu0
        %917 = vmatprep.mubr.f32.mxu0 0.0
        %918 = vmatmul.mubr.f32.gmra.mxu0 %v778
        %v919 = vpop.f32.mrf.mxu0
        %v920 = vadd.f32 0.0, %v919
        %v921 = vpop.f32.mrf.mxu0
        %922 = vmatprep.mubr.f32.mxu0 0.0
        %923 = vmatmul.mubr.f32.gmra.mxu0 %v781
        %v924 = vpop.f32.mrf.mxu0
        %v925 = vadd.f32 0.0, %v924
        %v926 = vpop.f32.mrf.mxu0
        %927 = vdwg.mxu0
        %v929 = vsel %vm593, %v718, 0
        %v932 = vsel %vm593, %v719, 0
        %v935 = vsel %vm593, %v720, 0
        %v938 = vsel %vm593, %v721, 0
        %v941 = vsel %vm593, %v722, 0
        %v944 = vsel %vm593, %v723, 0
        %v947 = vsel %vm593, %v724, 0
        %v950 = vsel %vm593, %v725, 0
        %v953 = vsel %vm593, %v726, 0
        %v956 = vsel %vm593, %v727, 0
        %v959 = vsel %vm593, %v728, 0
        %v962 = vsel %vm593, %v729, 0
        %v965 = vsel %vm593, %v730, 0
        %v968 = vsel %vm593, %v731, 0
        %v971 = vsel %vm593, %v732, 0
        %v974 = vsel %vm593, %v733, 0
        %976 = vmatprep.subr.mxu0 0.0
        %977 = vmatpush1.msra.mxu0 0.0
        %978 = vmatprep.subr.mxu0 0.0
        %979 = vmatpush1.msra.mxu0 0.0
        %980 = vmatprep.subr.mxu0 0.0
        %981 = vmatpush1.msra.mxu0 0.0
        %982 = vmatprep.subr.mxu0 0.0
        %983 = vmatpush1.msra.mxu0 0.0
        %984 = vmatprep.subr.mxu0 0.0
        %985 = vmatpush1.msra.mxu0 0.0
        %986 = vmatprep.subr.mxu0 0.0
        %987 = vmatpush1.msra.mxu0 0.0
        %988 = vmatprep.subr.mxu0 0.0
        %989 = vmatpush1.msra.mxu0 0.0
        %990 = vmatprep.subr.mxu0 0.0
        %991 = vmatpush1.msra.mxu0 0.0
        %992 = vmatprep.subr.mxu0 0.0
        %993 = vmatpush1.msra.mxu0 0.0
        %994 = vmatprep.subr.mxu0 0.0
        %995 = vmatpush1.msra.mxu0 0.0
        %996 = vmatprep.subr.mxu0 0.0
        %997 = vmatpush1.msra.mxu0 0.0
        %998 = vmatprep.subr.mxu0 0.0
        %999 = vmatpush1.msra.mxu0 0.0
        %1000 = vmatprep.subr.mxu0 0.0
        %1001 = vmatpush1.msra.mxu0 %v237
        %1002 = vmatprep.subr.mxu0 0.0
        %1003 = vmatpush1.msra.mxu0 %v236
        %1004 = vmatprep.subr.mxu0 0.0
        %1005 = vmatpush1.msra.mxu0 %v235
        %1006 = vmatprep.subr.mxu0 0.0
        %1007 = vmatpush1.msra.mxu0 %v234
        %1008 = vmatprep.subr.mxu0 0.0
        %1009 = vmatpush2.msra.mxu0 0.0
        %1010 = vmatprep.subr.mxu0 0.0
        %1011 = vmatpush2.msra.mxu0 0.0
        %1012 = vmatprep.subr.mxu0 0.0
        %1013 = vmatpush2.msra.mxu0 0.0
        %1014 = vmatprep.subr.mxu0 0.0
        %1015 = vmatpush2.msra.mxu0 0.0
        %1016 = vmatprep.subr.mxu0 0.0
        %1017 = vmatpush2.msra.mxu0 0.0
        %1018 = vmatprep.subr.mxu0 0.0
        %1019 = vmatpush2.msra.mxu0 0.0
        %1020 = vmatprep.subr.mxu0 0.0
        %1021 = vmatpush2.msra.mxu0 0.0
        %1022 = vmatprep.subr.mxu0 0.0
        %1023 = vmatpush2.msra.mxu0 0.0
        %1024 = vmatprep.subr.mxu0 0.0
        %1025 = vmatpush2.msra.mxu0 0.0
        %1026 = vmatprep.subr.mxu0 0.0
        %1027 = vmatpush2.msra.mxu0 0.0
        %1028 = vmatprep.subr.mxu0 0.0
        %1029 = vmatpush2.msra.mxu0 0.0
        %1030 = vmatprep.subr.mxu0 0.0
        %1031 = vmatpush2.msra.mxu0 0.0
        %1032 = vmatprep.subr.mxu0 0.0
        %1033 = vmatpush2.msra.mxu0 0.0
        %1034 = vmatprep.subr.mxu0 0.0
        %1035 = vmatpush2.msra.mxu0 0.0
        %1036 = vmatprep.subr.mxu0 0.0
        %1037 = vmatpush2.msra.mxu0 0.0
        %1038 = vmatprep.subr.mxu0 0.0
        %1039 = vmatpush2.msra.mxu0 0.0
        %1040 = vmatprep.mubr.f32.mxu0 0.0
        %1041 = vmatmul.mubr.f32.gmra.mxu0 %v929
        %v1042 = vpop.f32.mrf.mxu0
        %v1043 = vadd.f32 %v850, %v1042
        %v1044 = vpop.f32.mrf.mxu0
        %1045 = vmatprep.mubr.f32.mxu0 0.0
        %1046 = vmatmul.mubr.f32.gmra.mxu0 %v932
        %v1047 = vpop.f32.mrf.mxu0
        %v1048 = vadd.f32 %v855, %v1047
        %v1049 = vpop.f32.mrf.mxu0
        %1050 = vmatprep.mubr.f32.mxu0 0.0
        %1051 = vmatmul.mubr.f32.gmra.mxu0 %v935
        %v1052 = vpop.f32.mrf.mxu0
        %v1053 = vadd.f32 %v860, %v1052
        %v1054 = vpop.f32.mrf.mxu0
        %1055 = vmatprep.mubr.f32.mxu0 0.0
        %1056 = vmatmul.mubr.f32.gmra.mxu0 %v938
        %v1057 = vpop.f32.mrf.mxu0
        %v1058 = vadd.f32 %v865, %v1057
        %v1059 = vpop.f32.mrf.mxu0
        %1060 = vmatprep.mubr.f32.mxu0 0.0
        %1061 = vmatmul.mubr.f32.gmra.mxu0 %v941
        %v1062 = vpop.f32.mrf.mxu0
        %v1063 = vadd.f32 %v870, %v1062
        %v1064 = vpop.f32.mrf.mxu0
        %1065 = vmatprep.mubr.f32.mxu0 0.0
        %1066 = vmatmul.mubr.f32.gmra.mxu0 %v944
        %v1067 = vpop.f32.mrf.mxu0
        %v1068 = vadd.f32 %v875, %v1067
        %v1069 = vpop.f32.mrf.mxu0
        %1070 = vmatprep.mubr.f32.mxu0 0.0
        %1071 = vmatmul.mubr.f32.gmra.mxu0 %v947
        %v1072 = vpop.f32.mrf.mxu0
        %v1073 = vadd.f32 %v880, %v1072
        %v1074 = vpop.f32.mrf.mxu0
        %1075 = vmatprep.mubr.f32.mxu0 0.0
        %1076 = vmatmul.mubr.f32.gmra.mxu0 %v950
        %v1077 = vpop.f32.mrf.mxu0
        %v1078 = vadd.f32 %v885, %v1077
        %v1079 = vpop.f32.mrf.mxu0
        %1080 = vmatprep.mubr.f32.mxu0 0.0
        %1081 = vmatmul.mubr.f32.gmra.mxu0 %v953
        %v1082 = vpop.f32.mrf.mxu0
        %v1083 = vadd.f32 %v890, %v1082
        %v1084 = vpop.f32.mrf.mxu0
        %1085 = vmatprep.mubr.f32.mxu0 0.0
        %1086 = vmatmul.mubr.f32.gmra.mxu0 %v956
        %v1087 = vpop.f32.mrf.mxu0
        %v1088 = vadd.f32 %v895, %v1087
        %v1089 = vpop.f32.mrf.mxu0
        %1090 = vmatprep.mubr.f32.mxu0 0.0
        %1091 = vmatmul.mubr.f32.gmra.mxu0 %v959
        %v1092 = vpop.f32.mrf.mxu0
        %v1093 = vadd.f32 %v900, %v1092
        %v1094 = vpop.f32.mrf.mxu0
        %1095 = vmatprep.mubr.f32.mxu0 0.0
        %1096 = vmatmul.mubr.f32.gmra.mxu0 %v962
        %v1097 = vpop.f32.mrf.mxu0
        %v1098 = vadd.f32 %v905, %v1097
        %v1099 = vpop.f32.mrf.mxu0
        %1100 = vmatprep.mubr.f32.mxu0 0.0
        %1101 = vmatmul.mubr.f32.gmra.mxu0 %v965
        %v1102 = vpop.f32.mrf.mxu0
        %v1103 = vadd.f32 %v910, %v1102
        %v1104 = vpop.f32.mrf.mxu0
        %1105 = vmatprep.mubr.f32.mxu0 0.0
        %1106 = vmatmul.mubr.f32.gmra.mxu0 %v968
        %v1107 = vpop.f32.mrf.mxu0
        %v1108 = vadd.f32 %v915, %v1107
        %v1109 = vpop.f32.mrf.mxu0
        %1110 = vmatprep.mubr.f32.mxu0 0.0
        %1111 = vmatmul.mubr.f32.gmra.mxu0 %v971
        %v1112 = vpop.f32.mrf.mxu0
        %v1113 = vadd.f32 %v920, %v1112
        %v1114 = vpop.f32.mrf.mxu0
        %1115 = vmatprep.mubr.f32.mxu0 0.0
        %1116 = vmatmul.mubr.f32.gmra.mxu0 %v974
        %v1117 = vpop.f32.mrf.mxu0
        %v1118 = vadd.f32 %v925, %v1117
        %v1119 = vpop.f32.mrf.mxu0
        %1120 = vdwg.mxu0
        %v1121 = vlaneseq
        %v1122 = vshrl.u32 %v1121, 7
        %v1123 = vsub.s32 0, %v1122
        %v1124 = vrot.slane %v229, %v1123
        %v1125 = vadd.f32 %v1043, %v1124
        %v1126 = vadd.f32 %v1048, %v1124
        %v1127 = vadd.f32 %v1053, %v1124
        %v1128 = vadd.f32 %v1058, %v1124
        %v1129 = vadd.f32 %v1063, %v1124
        %v1130 = vadd.f32 %v1068, %v1124
        %v1131 = vadd.f32 %v1073, %v1124
        %v1132 = vadd.f32 %v1078, %v1124
        %v1133 = vadd.f32 %v1083, %v1124
        %v1134 = vadd.f32 %v1088, %v1124
        %v1135 = vadd.f32 %v1093, %v1124
        %v1136 = vadd.f32 %v1098, %v1124
        %v1137 = vadd.f32 %v1103, %v1124
        %v1138 = vadd.f32 %v1108, %v1124
        %v1139 = vadd.f32 %v1113, %v1124
        %v1140 = vadd.f32 %v1118, %v1124
        %v1141 = vmax.f32 %v1125, 0.0
        %v1142 = vmax.f32 %v1126, 0.0
        %v1143 = vmax.f32 %v1127, 0.0
        %v1144 = vmax.f32 %v1128, 0.0
        %v1145 = vmax.f32 %v1129, 0.0
        %v1146 = vmax.f32 %v1130, 0.0
        %v1147 = vmax.f32 %v1131, 0.0
        %v1148 = vmax.f32 %v1132, 0.0
        %v1149 = vmax.f32 %v1133, 0.0
        %v1150 = vmax.f32 %v1134, 0.0
        %v1151 = vmax.f32 %v1135, 0.0
        %v1152 = vmax.f32 %v1136, 0.0
        %v1153 = vmax.f32 %v1137, 0.0
        %v1154 = vmax.f32 %v1138, 0.0
        %v1155 = vmax.f32 %v1139, 0.0
        %v1156 = vmax.f32 %v1140, 0.0
        %1158 = vset.pattern.permute.xlu0 0
        %1159 = vperm.xlu0 %1158, %v231
        %v1160 = vpop.permute.xlu0 %1159
        %v1163 = vsel %vm239, %v230, 0
        %v1166 = vsel %vm239, %v1141, 0
        %v1169 = vsel %vm239, %v1142, 0
        %v1172 = vsel %vm239, %v1143, 0
        %v1175 = vsel %vm239, %v1144, 0
        %v1178 = vsel %vm239, %v1145, 0
        %v1181 = vsel %vm239, %v1146, 0
        %v1184 = vsel %vm239, %v1147, 0
        %v1187 = vsel %vm239, %v1148, 0
        %v1190 = vsel %vm239, %v1149, 0
        %v1193 = vsel %vm239, %v1150, 0
        %v1196 = vsel %vm239, %v1151, 0
        %v1199 = vsel %vm239, %v1152, 0
        %v1202 = vsel %vm239, %v1153, 0
        %v1205 = vsel %vm239, %v1154, 0
        %v1208 = vsel %vm239, %v1155, 0
        %v1211 = vsel %vm239, %v1156, 0
        %1213 = vmatprep.subr.mxu0 0.0
        %1214 = vmatpush1.xpose.msra.mxu0 %v1211
        %1215 = vmatprep.subr.mxu0 0.0
        %1216 = vmatpush1.xpose.msra.mxu0 %v1208
        %1217 = vmatprep.subr.mxu0 0.0
        %1218 = vmatpush1.xpose.msra.mxu0 %v1205
        %1219 = vmatprep.subr.mxu0 0.0
        %1220 = vmatpush1.xpose.msra.mxu0 %v1202
        %1221 = vmatprep.subr.mxu0 0.0
        %1222 = vmatpush1.xpose.msra.mxu0 %v1199
        %1223 = vmatprep.subr.mxu0 0.0
        %1224 = vmatpush1.xpose.msra.mxu0 %v1196
        %1225 = vmatprep.subr.mxu0 0.0
        %1226 = vmatpush1.xpose.msra.mxu0 %v1193
        %1227 = vmatprep.subr.mxu0 0.0
        %1228 = vmatpush1.xpose.msra.mxu0 %v1190
        %1229 = vmatprep.subr.mxu0 0.0
        %1230 = vmatpush1.xpose.msra.mxu0 %v1187
        %1231 = vmatprep.subr.mxu0 0.0
        %1232 = vmatpush1.xpose.msra.mxu0 %v1184
        %1233 = vmatprep.subr.mxu0 0.0
        %1234 = vmatpush1.xpose.msra.mxu0 %v1181
        %1235 = vmatprep.subr.mxu0 0.0
        %1236 = vmatpush1.xpose.msra.mxu0 %v1178
        %1237 = vmatprep.subr.mxu0 0.0
        %1238 = vmatpush1.xpose.msra.mxu0 %v1175
        %1239 = vmatprep.subr.mxu0 0.0
        %1240 = vmatpush1.xpose.msra.mxu0 %v1172
        %1241 = vmatprep.subr.mxu0 0.0
        %1242 = vmatpush1.xpose.msra.mxu0 %v1169
        %1243 = vmatprep.subr.mxu0 0.0
        %1244 = vmatpush1.xpose.msra.mxu0 %v1166
        %1245 = vmatprep.subr.mxu0 0.0
        %1246 = vmatpush2.xpose.msra.mxu0 0.0
        %1247 = vmatprep.subr.mxu0 0.0
        %1248 = vmatpush2.xpose.msra.mxu0 0.0
        %1249 = vmatprep.subr.mxu0 0.0
        %1250 = vmatpush2.xpose.msra.mxu0 0.0
        %1251 = vmatprep.subr.mxu0 0.0
        %1252 = vmatpush2.xpose.msra.mxu0 0.0
        %1253 = vmatprep.subr.mxu0 0.0
        %1254 = vmatpush2.xpose.msra.mxu0 0.0
        %1255 = vmatprep.subr.mxu0 0.0
        %1256 = vmatpush2.xpose.msra.mxu0 0.0
        %1257 = vmatprep.subr.mxu0 0.0
        %1258 = vmatpush2.xpose.msra.mxu0 0.0
        %1259 = vmatprep.subr.mxu0 0.0
        %1260 = vmatpush2.xpose.msra.mxu0 0.0
        %1261 = vmatprep.subr.mxu0 0.0
        %1262 = vmatpush2.xpose.msra.mxu0 0.0
        %1263 = vmatprep.subr.mxu0 0.0
        %1264 = vmatpush2.xpose.msra.mxu0 0.0
        %1265 = vmatprep.subr.mxu0 0.0
        %1266 = vmatpush2.xpose.msra.mxu0 0.0
        %1267 = vmatprep.subr.mxu0 0.0
        %1268 = vmatpush2.xpose.msra.mxu0 0.0
        %1269 = vmatprep.subr.mxu0 0.0
        %1270 = vmatpush2.xpose.msra.mxu0 0.0
        %1271 = vmatprep.subr.mxu0 0.0
        %1272 = vmatpush2.xpose.msra.mxu0 0.0
        %1273 = vmatprep.subr.mxu0 0.0
        %1274 = vmatpush2.xpose.msra.mxu0 0.0
        %1275 = vmatprep.subr.mxu0 0.0
        %1276 = vmatpush2.xpose.msra.mxu0 0.0
        %1277 = vmatprep.mubr.f32.mxu0 0.0
        %1278 = vmatmul.mubr.f32.gmra.mxu0 %v1163
        %v1279 = vpop.f32.mrf.mxu0
        %v1280 = vadd.f32 %v1160, %v1279
        %v1281 = vpop.f32.mrf.mxu0
        %1282 = vdwg.mxu0
        %1283 = vst [vmem:[%s179] sm:$0x1] %v1280
        %s1284 = sand.u32 %s98, 1
        %s1285 = scalar_lea.sflag [#allocation3], %s1284
        %s1286 = sand.u32 %s98, 1
        %s1287 = scalar_lea.vmem [#allocation2], %s1286
        // Predicated region
        $region33: #{forward.1} parent=31 // pred_check
          %p1288 = pneg %p108
        $region34: #{forward.1} parent=31 // pred_check_branch
          %1290 = sbr.rel (%p1288) target = $region36
        $region35: #{forward.1} parent=31 // pred_region
          %s1292 = ssub.s32 16, 16
          %1293 = vsyncadd %s1285, %s1292
          %s1294 = smul.addr %s17, 16
          %s1295 = scalar_lea.hbm %s3, %s1294
          %s1297 = sshll.u32 %s1287, 4
          %s1298 = int_to_ptr.vmem [resolvable:$true] %s1297
          %1300 = dma.vmem_to_hbm [thread:$0]  %s1298, 16, %s1295, %s1285
        $region36: #{forward.1} parent=31 // pred_fallthru
          _
      $region32: #{forward.1} parent=5 // pred_fallthru
        _
      %p1301 = scmp.le.s32.totalorder 2, %s12
      // Predicated region
      $region37: #{forward.1} parent=5 // pred_check
        %p1302 = pneg %p1301
      $region38: #{forward.1} parent=5 // pred_check_branch
        %1304 = sbr.rel (%p1302) target = $region40
      $region39: #{forward.1} parent=5 // pred_region
        %s1305 = ssub.s32 %s12, 2
        // Predicated region
        $region41: #{forward.1} parent=39 // pred_check
          %p1306 = pneg %p114
        $region42: #{forward.1} parent=39 // pred_check_branch
          %1308 = sbr.rel (%p1306) target = $region44
        $region43: #{forward.1} parent=39 // pred_region
          %s1309 = sand.u32 %s99, 1
          %s1310 = scalar_lea.sflag [#allocation3], %s1309
          %s1311 = sand.u32 %s99, 1
          %s1312 = scalar_lea.vmem [#allocation2], %s1311
          %1313 = dma.done %s1310, 16
        $region44: #{forward.1} parent=39 // pred_fallthru
          _
      $region40: #{forward.1} parent=5 // pred_fallthru
        _
    $region6: #{forward.1} parent=1 // loop_footer
      %s16 = sadd.s32 1, %s12
    $region7: #{forward.1} parent=1 // loop_footer_branch
      %11 = sbr.rel target = $region3
    $region8: #{forward.1} parent=1 // loop_exit
      _
    %1314 = vsyncpa [#allocation3], 1
    %s1315 = scalar_lea.sflag [#allocation3], 1
    %1316 = vsyncpa %s1315, 1

</llo_original>
